<compile_context>
chip_gen: v6e
topology: v6e:2x2x1
jax: 0.10.0
libtpu: 0.0.40
codegen_flags: <defaults>
</compile_context>

<pallas_src>
import functools

import jax
import jax.numpy as jnp
from jax import lax
from jax.experimental import pallas as pl
from jax.experimental.pallas import tpu as pltpu

MATMUL_DTYPE = jnp.bfloat16       # jnp.float32 for exact f32 matmul semantics
BN_EPS = 1e-5                     # PyTorch BatchNorm1d default
LANE = 128
MAX_HIDDEN_BLOCK = 2 * LANE       # 256-lane packed hidden blocks (v6e/v7x MXU width)
VMEM_LIMIT = 48 * 1024 * 1024     # leaves headroom under v7x's 64 MiB physical VMEM


def _round_up(x, m):
    return (x + m - 1) // m * m


# ----------------------------- Pallas kernels -----------------------------

def _linear_tiled_kernel(x_ref, w_ref, b_ref, o_ref, acc_ref):
    """Tiled y = x @ w + b with an f32 VMEM accumulator over the K grid axis."""
    k = pl.program_id(1)

    @pl.when(k == 0)
    def _():
        acc_ref[...] = jnp.zeros_like(acc_ref)

    acc_ref[...] += jnp.dot(x_ref[...], w_ref[...],
                            preferred_element_type=jnp.float32)

    @pl.when(k == pl.num_programs(1) - 1)
    def _():
        o_ref[...] = acc_ref[...] + b_ref[...]


def _layer_fused_kernel(x_ref, w_ref, s_ref, p_ref, o_ref, *, inv_batch, eps):
    """One GROUP of packed DAG terms per grid step.

    x_ref: (B, K_pad)      group input slab (terms' inputs concatenated, 0-padded)
    w_ref: (1, K_pad, C)   block-diagonal packed linear weights (pre-transposed)
    s_ref: (1, C, A)       aux selector: S[lane, r] = aux1 weight of term r for
                           that lane (0 outside term r's H-lane segment)
    p_ref: (1, 8, C)       per-lane params:
        row 0 linear bias | row 1 BN gamma | row 2 BN beta   (hidden lanes)
        row 3 aux1 bias   | row 4 aux2 w   | row 5 aux2 bias (aux lanes, first A)
    o_ref: (B, C + A)      lanes [0, C)   = BatchNorm outputs (H lanes per term)
                           lanes [C, C+A) = aux head outputs (1 lane per term)
    """
    c_lanes = w_ref.shape[2]
    a_lanes = s_ref.shape[2]

    x = x_ref[...]                            # (B, K_pad)  MATMUL_DTYPE
    w = w_ref[0]                              # (K_pad, C)  MATMUL_DTYPE
    s = s_ref[0]                              # (C, A)      f32
    p = p_ref[0]                              # (8, C)      f32

    # Linear (MXU, f32 accumulation) -> tanh (EUP).
    z = jnp.dot(x, w, preferred_element_type=jnp.float32) + p[0:1, :]
    t = jnp.tanh(z)

    # BatchNorm1d, training-mode full-batch (biased) statistics.  Per-lane
    # stats == per-term stats because packed terms never share a lane.
    # NOTE: correct only because the batch dim is never tiled across the grid.
    mu = jnp.sum(t, axis=0, keepdims=True) * inv_batch
    d = t - mu
    var = jnp.sum(d * d, axis=0, keepdims=True) * inv_batch
    bn = p[1:2, :] * (d * lax.rsqrt(var + eps)) + p[2:3, :]          # (B, C)

    # Aux head for every packed term: the per-term H-lane reduction with the
    # aux1 weights is one small (C, A) mask-matmul, then the 1x1 aux layer is a
    # per-lane affine.  Unused term slots carry all-zero params -> output 0.
    a1 = jnp.tanh(jnp.dot(bn, s, preferred_element_type=jnp.float32)
                  + p[3:4, :a_lanes])
    aux = a1 * p[4:5, :a_lanes] + p[5:6, :a_lanes]                   # (B, A)

    # Lane-dense stores (both slices start on 128-lane boundaries).
    o_ref[:, :c_lanes] = bn
    o_ref[:, c_lanes:] = aux


# ----------------------------- Pallas wrappers -----------------------------

def pallas_linear_tiled(x, w, b):
    """y = x @ w + b.

    x: (B, K) MATMUL_DTYPE;  w: (K, N) pre-transposed / zero-padded;  b: (1, N) f32.
    Grid: N tiles ('parallel' -> megacore / v7x 2 TCs) x K tiles ('arbitrary'),
    f32 VMEM accumulator.  The batch dim is never tiled (full-batch BN later
    relies on the same convention).
    """
    B, K = x.shape
    Kw, N = w.shape
    assert K == Kw and N % LANE == 0
    tn = N if N <= 512 else next(t for t in (512, 384, 256, 128) if N % t == 0)
    if K <= 1024:
        tk = K
    else:
        tk = 512
        assert K % tk == 0, "pad K to a multiple of 512 at build time"
    return pl.pallas_call(
        _linear_tiled_kernel,
        out_shape=jax.ShapeDtypeStruct((B, N), jnp.float32),
        grid=(N // tn, K // tk),
        in_specs=[pl.BlockSpec((B, tk), lambda n, k: (0, k)),
                  pl.BlockSpec((tk, tn), lambda n, k: (k, n)),
                  pl.BlockSpec((1, tn), lambda n, k: (0, n))],
        out_specs=pl.BlockSpec((B, tn), lambda n, k: (0, n)),
        scratch_shapes=[pltpu.VMEM((B, tn), jnp.float32)],
        compiler_params=pltpu.CompilerParams(
            dimension_semantics=("parallel", "arbitrary"),
            vmem_limit_bytes=VMEM_LIMIT),
    )(x, w, b)


def pallas_layer_fused(x_slab, w_slab, s_slab, p_slab):
    """Fused Linear->tanh->BatchNorm + aux head for one DAG layer.

    Grid: one step per group of packed terms ('parallel' -> megacore)."""
    B = x_slab.shape[0]
    G, K_pad, C = w_slab.shape
    A = s_slab.shape[2]
    kernel = functools.partial(_layer_fused_kernel, inv_batch=1.0 / B, eps=BN_EPS)
    # TODO(synk): sweep pipeline_mode=pl.Buffered(3) on the w/s/p specs once the
    # per-group parameter DMA latency shows up in real traces.
    return pl.pallas_call(
        kernel,
        out_shape=jax.ShapeDtypeStruct((B, G * (C + A)), jnp.float32),
        grid=(G,),
        in_specs=[pl.BlockSpec((B, K_pad), lambda g: (0, g)),
                  pl.BlockSpec((1, K_pad, C), lambda g: (g, 0, 0)),
                  pl.BlockSpec((1, C, A), lambda g: (g, 0, 0)),
                  pl.BlockSpec((1, 8, C), lambda g: (g, 0, 0))],
        out_specs=pl.BlockSpec((B, C + A), lambda g: (0, g)),
        compiler_params=pltpu.CompilerParams(
            dimension_semantics=("parallel",),
            vmem_limit_bytes=VMEM_LIMIT),
    )(x_slab, w_slab, s_slab, p_slab)


# ----------------------------- Model build -----------------------------

def _linear_init(key, out_dim, in_dim):
    # PyTorch nn.Linear default init: U(-1/sqrt(fan_in), 1/sqrt(fan_in)).
    k1, k2 = jax.random.split(key)
    bound = 1.0 / float(in_dim) ** 0.5
    w = jax.random.uniform(k1, (out_dim, in_dim), jnp.float32, -bound, bound)
    b = jax.random.uniform(k2, (out_dim,), jnp.float32, -bound, bound)
    return w, b


def _layer_block_dims(num_terms, hidden):
    """Packed hidden-block width C, terms-per-block, and aux-block width A."""
    c = _round_up(min(num_terms * hidden, MAX_HIDDEN_BLOCK), LANE)
    c = max(c, _round_up(hidden, LANE))        # single term wider than a block
    tpb = max(c // hidden, 1)
    a = _round_up(tpb, LANE)
    return c, tpb, a


def build_drugcell_model(key, *, term_direct_gene_map, term_layer_list,
                         term_neighbor_map, root, ngene, nfeatures,
                         num_hiddens_genotype, num_cancer_types):
    H = num_hiddens_genotype
    direct_dim = ngene * nfeatures

    # ---- all <term>_direct_gene_layer's packed into one (K, N_pad) weight ----
    direct_offsets = {}
    w_cols, b_cols = [], []
    off = 0
    for term, gene_set in term_direct_gene_map.items():
        n_out = len(gene_set)
        key, sub = jax.random.split(key)
        w, b = _linear_init(sub, n_out, direct_dim)
        w_cols.append(jnp.transpose(w))          # pre-transpose to (in, out)
        b_cols.append(b)
        direct_offsets[term] = (off, n_out)
        off += n_out
    n_pad = _round_up(max(off, 1), LANE)
    k_dir = direct_dim if direct_dim <= 1024 else _round_up(direct_dim, 512)
    w_direct = jnp.concatenate(w_cols, axis=1)
    w_direct = jnp.pad(w_direct, ((0, k_dir - direct_dim),
                                  (0, n_pad - off))).astype(MATMUL_DTYPE)
    b_direct = jnp.pad(jnp.concatenate(b_cols).reshape(1, off),
                       ((0, 0), (0, n_pad - off)))

    # ---- per-DAG-layer packed groups (multiple terms per lane block) ----
    layers, layer_plans = [], []
    for layer in term_layer_list:
        C, tpb, A = _layer_block_dims(len(layer), H)
        # TODO(synk): bin-pack terms by input size (not layer order) so group
        # input widths are balanced and K_pad is not set by one oversized group.
        groups = [layer[i:i + tpb] for i in range(0, len(layer), tpb)]

        k_of = {}
        for term in layer:
            k = H * len(term_neighbor_map[term])
            if term in term_direct_gene_map:
                k += len(term_direct_gene_map[term])
            k_of[term] = k
        K_pad = _round_up(max(sum(k_of[t] for t in grp) for grp in groups), LANE)

        w_blocks, s_blocks, p_blocks, layout = [], [], [], []
        for grp in groups:
            wg = jnp.zeros((K_pad, C), jnp.float32)
            sg = jnp.zeros((C, A), jnp.float32)
            pg = jnp.zeros((8, C), jnp.float32)
            g_layout, off_in = [], 0
            for r, term in enumerate(grp):
                k = k_of[term]
                key, kl, ka1, ka2 = jax.random.split(key, 4)
                w, b = _linear_init(kl, H, k)       # <term>_linear_layer
                w1, b1 = _linear_init(ka1, 1, H)    # <term>_aux_linear_layer1
                w2, b2 = _linear_init(ka2, 1, 1)    # <term>_aux_linear_layer2
                lane0 = r * H
                wg = wg.at[off_in:off_in + k, lane0:lane0 + H].set(jnp.transpose(w))
                sg = sg.at[lane0:lane0 + H, r].set(w1[0])
                pg = pg.at[0, lane0:lane0 + H].set(b)     # linear bias
                pg = pg.at[1, lane0:lane0 + H].set(1.0)   # BN gamma (pad lanes stay 0)
                # row 2: BN beta = 0
                pg = pg.at[3, r].set(b1[0])               # aux1 bias
                pg = pg.at[4, r].set(w2[0, 0])            # aux2 weight
                pg = pg.at[5, r].set(b2[0])               # aux2 bias (b2 is 1-D)
                g_layout.append((term, k, lane0, r))
                off_in += k
            w_blocks.append(wg.astype(MATMUL_DTYPE))
            s_blocks.append(sg)
            p_blocks.append(pg)
            layout.append(g_layout)
        layers.append({"w": jnp.stack(w_blocks),
                       "s": jnp.stack(s_blocks),
                       "p": jnp.stack(p_blocks)})
        layer_plans.append({"C": C, "A": A, "K_pad": K_pad, "groups": layout})

    # ---- final linear layer: tiny, kept unpadded f32 (plain XLA dot) ----
    key, k_fin = jax.random.split(key)
    wf, bf = _linear_init(k_fin, num_cancer_types, H)
    final_w = jnp.transpose(wf)                     # (H, num_cancer_types)
    final_b = bf.reshape(1, num_cancer_types)

    params = {"direct_w": w_direct, "direct_b": b_direct,
              "layers": layers, "final_w": final_w, "final_b": final_b}
    plan = {"hidden": H, "root": root, "num_cancer_types": num_cancer_types,
            "term_direct_gene_map": term_direct_gene_map,
            "term_neighbor_map": term_neighbor_map,
            "direct_offsets": direct_offsets,
            "layer_plans": layer_plans}
    return params, plan


# ----------------------------- Forward pass -----------------------------

def drugcell_forward(params, x, y, *, plan):
    H = plan["hidden"]

    # input_features = torch.cat([x, y], 1); cast ONCE to the MXU dtype.
    input_features = jnp.concatenate([x, y], axis=1)
    k_dir = params["direct_w"].shape[0]
    if input_features.shape[1] < k_dir:
        input_features = jnp.pad(
            input_features, ((0, 0), (0, k_dir - input_features.shape[1])))
    direct_out = pallas_linear_tiled(input_features.astype(MATMUL_DTYPE),
                                     params["direct_w"], params["direct_b"])
    term_gene_out_map = {term: direct_out[:, o:o + n]
                         for term, (o, n) in plan["direct_offsets"].items()}

    term_NN_out_map, aux_out_map = {}, {}
    for layer_plan, layer_params in zip(plan["layer_plans"], params["layers"]):
        C, A, K_pad = layer_plan["C"], layer_plan["A"], layer_plan["K_pad"]

        # Assemble the per-layer group input slab (B, n_groups * K_pad), cast
        # once to the MXU dtype.
        # TODO(synk): replace this concat/pad glue with a build-time column
        # permutation of the previous layer's output slab + scalar-prefetch
        # offsets in the index_map so activations are not re-staged through HBM.
        blocks = []
        for g_layout in layer_plan["groups"]:
            cols = []
            for term, _, _, _ in g_layout:
                for child in plan["term_neighbor_map"][term]:
                    cols.append(term_NN_out_map[child])
                if term in plan["term_direct_gene_map"]:
                    cols.append(term_gene_out_map[term])
            xg = cols[0] if len(cols) == 1 else jnp.concatenate(cols, axis=1)
            if xg.shape[1] < K_pad:
                xg = jnp.pad(xg, ((0, 0), (0, K_pad - xg.shape[1])))
            blocks.append(xg)
        x_slab = (blocks[0] if len(blocks) == 1
                  else jnp.concatenate(blocks, axis=1)).astype(MATMUL_DTYPE)

        out_slab = pallas_layer_fused(x_slab, layer_params["w"],
                                      layer_params["s"], layer_params["p"])

        for g, g_layout in enumerate(layer_plan["groups"]):
            base = g * (C + A)
            for term, _, lane0, r in g_layout:
                term_NN_out_map[term] = out_slab[:, base + lane0:base + lane0 + H]
                aux_out_map[term] = out_slab[:, base + C + r:base + C + r + 1]

    # Final H -> num_cancer_types projection: a tiny matmul, cheaper as a plain
    # XLA dot than a dedicated pallas_call (per the perf review).
    out = jnp.dot(term_NN_out_map[plan["root"]],
                  params["final_w"]) + params["final_b"]
    term_NN_out_map["final"] = out
    aux_out_map["final"] = out
    # TODO(synk): 'final_softmax_layer' is registered in __init__ but never used
    # in the PyTorch forward(); intentionally not applied here either.
    return aux_out_map, term_NN_out_map


# ----------------------------- Example / main -----------------------------

if __name__ == "__main__":
    # Small synthetic ontology (the PyTorch module builds this from a networkx
    # DAG; here the topological layering is written out directly).
    ngene = 8
    nfeatures = 2                 # x and y each carry one feature per gene
    num_hiddens_genotype = 8
    num_cancer_types = 4
    batch = 8
    root = "ROOT"

    term_direct_gene_map = {
        "T1": [0, 1, 2],
        "T2": [3, 4],
        "T3": [5, 6, 7, 1],
        "T4": [2, 5],
        "ROOT": [0, 4, 7],
    }
    term_neighbor_map = {
        "T1": [], "T2": [], "T3": [],
        "T4": ["T1", "T2"],
        "T5": ["T3"],
        "ROOT": ["T4", "T5"],
    }
    term_layer_list = [["T1", "T2", "T3"], ["T4", "T5"], ["ROOT"]]

    key = jax.random.PRNGKey(0)
    key, k_params, kx, ky = jax.random.split(key, 4)

    params, plan = build_drugcell_model(
        k_params,
        term_direct_gene_map=term_direct_gene_map,
        term_layer_list=term_layer_list,
        term_neighbor_map=term_neighbor_map,
        root=root,
        ngene=ngene,
        nfeatures=nfeatures,
        num_hiddens_genotype=num_hiddens_genotype,
        num_cancer_types=num_cancer_types,
    )

    x = jax.random.normal(kx, (batch, ngene), jnp.float32)
    y = jax.random.normal(ky, (batch, ngene), jnp.float32)

    fwd = jax.jit(functools.partial(drugcell_forward, plan=plan))
    aux_out_map, term_NN_out_map = fwd(params, x, y)
    jax.block_until_ready((aux_out_map, term_NN_out_map))

    assert term_NN_out_map["final"].shape == (batch, num_cancer_types)
    assert aux_out_map["final"].shape == (batch, num_cancer_types)
    assert aux_out_map["ROOT"].shape == (batch, 1)
    assert term_NN_out_map["ROOT"].shape == (batch, num_hiddens_genotype)
    for v in aux_out_map.values():
        assert bool(jnp.all(jnp.isfinite(v)))
    for v in term_NN_out_map.values():
        assert bool(jnp.all(jnp.isfinite(v)))
    print("KERNEL_OK")
</pallas_src>

<mosaic_0001>
module attributes {stable_mosaic.version = 11 : i64} {
  func.func @_linear_tiled_kernel(%arg0: i32, %arg1: i32, %arg2: memref<8x16xbf16, #tpu.memory_space<vmem>>, %arg3: memref<16x128xbf16, #tpu.memory_space<vmem>>, %arg4: memref<1x128xf32, #tpu.memory_space<vmem>>, %arg5: memref<8x128xf32, #tpu.memory_space<vmem>>, %arg6: memref<8x128xf32, #tpu.memory_space<vmem>>) attributes {dimension_semantics = [#tpu.dimension_semantics<parallel>, #tpu.dimension_semantics<arbitrary>], iteration_bounds = array<i64: 1, 1>, scalar_prefetch = 0 : i64, scratch_operands = 1 : i64, tpu.core_type = #tpu.core_type<tc>, window_params = [{transform_indices = @transform_0, window_bounds = array<i64: 8, 16>}, {transform_indices = @transform_1, window_bounds = array<i64: 16, 128>}, {transform_indices = @transform_2, window_bounds = array<i64: 1, 128>}, {transform_indices = @transform_3, window_bounds = array<i64: 8, 128>}]} {
    %c0_i32 = arith.constant 0 : i32
    %0 = arith.cmpi eq, %arg1, %c0_i32 : i32
    %1 = arith.extui %0 : i1 to i32
    %c0_i32_0 = arith.constant 0 : i32
    %2 = arith.cmpi ne, %1, %c0_i32_0 : i32
    scf.if %2 {
      %cst_10 = arith.constant 0.000000e+00 : f32
      %12 = vector.broadcast %cst_10 : f32 to vector<8x128xf32>
      %c0_11 = arith.constant 0 : index
      %c0_12 = arith.constant 0 : index
      %13 = vector.load %arg6[%c0_11, %c0_12] : memref<8x128xf32, #tpu.memory_space<vmem>>, vector<8x128xf32>
      tpu.vector_store %arg6[%c0_11, %c0_12], %12 {strides = array<i32>} : memref<8x128xf32, #tpu.memory_space<vmem>>, vector<8x128xf32>,
    } else {
    }
    %c0 = arith.constant 0 : index
    %c0_1 = arith.constant 0 : index
    %3 = vector.load %arg6[%c0, %c0_1] : memref<8x128xf32, #tpu.memory_space<vmem>>, vector<8x128xf32>
    %c0_2 = arith.constant 0 : index
    %c0_3 = arith.constant 0 : index
    %4 = vector.load %arg2[%c0_2, %c0_3] : memref<8x16xbf16, #tpu.memory_space<vmem>>, vector<8x16xbf16>
    %c0_4 = arith.constant 0 : index
    %c0_5 = arith.constant 0 : index
    %5 = vector.load %arg3[%c0_4, %c0_5] : memref<16x128xbf16, #tpu.memory_space<vmem>>, vector<16x128xbf16>
    %cst = arith.constant dense<0.000000e+00> : vector<8x128xf32>
    %6 = tpu.matmul %4, %5, %cst {dimension_numbers = #tpu.dot_dimension_numbers<[1], [0], [0], [1], [0, 0, 1, 1], [], []>} : vector<8x16xbf16>, vector<16x128xbf16>, vector<8x128xf32> -> vector<8x128xf32>
    %7 = arith.addf %3, %6 : vector<8x128xf32>
    %c0_6 = arith.constant 0 : index
    %c0_7 = arith.constant 0 : index
    %8 = vector.load %arg6[%c0_6, %c0_7] : memref<8x128xf32, #tpu.memory_space<vmem>>, vector<8x128xf32>
    tpu.vector_store %arg6[%c0_6, %c0_7], %7 {strides = array<i32>} : memref<8x128xf32, #tpu.memory_space<vmem>>, vector<8x128xf32>,
    %c0_i32_8 = arith.constant 0 : i32
    %9 = arith.cmpi eq, %arg1, %c0_i32_8 : i32
    %10 = arith.extui %9 : i1 to i32
    %c0_i32_9 = arith.constant 0 : i32
    %11 = arith.cmpi ne, %10, %c0_i32_9 : i32
    scf.if %11 {
      %c0_10 = arith.constant 0 : index
      %c0_11 = arith.constant 0 : index
      %12 = vector.load %arg6[%c0_10, %c0_11] : memref<8x128xf32, #tpu.memory_space<vmem>>, vector<8x128xf32>
      %c0_12 = arith.constant 0 : index
      %c0_13 = arith.constant 0 : index
      %13 = vector.load %arg4[%c0_12, %c0_13] : memref<1x128xf32, #tpu.memory_space<vmem>>, vector<1x128xf32>
      %14 = vector.broadcast %13 : vector<1x128xf32> to vector<8x128xf32>
      %15 = arith.addf %12, %14 : vector<8x128xf32>
      %c0_14 = arith.constant 0 : index
      %c0_15 = arith.constant 0 : index
      %16 = vector.load %arg5[%c0_14, %c0_15] : memref<8x128xf32, #tpu.memory_space<vmem>>, vector<8x128xf32>
      tpu.vector_store %arg5[%c0_14, %c0_15], %15 {strides = array<i32>} : memref<8x128xf32, #tpu.memory_space<vmem>>, vector<8x128xf32>,
    } else {
    }
    return
  }
  func.func @transform_0(%arg0: i32, %arg1: i32) -> (i32, i32) {
    %c0_i32 = arith.constant 0 : i32
    %c0_i32_0 = arith.constant 0 : i32
    return %c0_i32, %arg1 : i32, i32
  }
  func.func @transform_1(%arg0: i32, %arg1: i32) -> (i32, i32) {
    %c0_i32 = arith.constant 0 : i32
    return %arg1, %arg0 : i32, i32
  }
  func.func @transform_2(%arg0: i32, %arg1: i32) -> (i32, i32) {
    %c0_i32 = arith.constant 0 : i32
    %c0_i32_0 = arith.constant 0 : i32
    return %c0_i32, %arg0 : i32, i32
  }
  func.func @transform_3(%arg0: i32, %arg1: i32) -> (i32, i32) {
    %c0_i32 = arith.constant 0 : i32
    %c0_i32_0 = arith.constant 0 : i32
    return %c0_i32, %arg0 : i32, i32
  }
}

module attributes {stable_mosaic.version = 11 : i64} {
  func.func @_layer_fused_kernel(%arg0: i32, %arg1: memref<8x128xbf16, #tpu.memory_space<vmem>>, %arg2: memref<1x128x128xbf16, #tpu.memory_space<vmem>>, %arg3: memref<1x128x128xf32, #tpu.memory_space<vmem>>, %arg4: memref<1x8x128xf32, #tpu.memory_space<vmem>>, %arg5: memref<8x256xf32, #tpu.memory_space<vmem>>) attributes {dimension_semantics = [#tpu.dimension_semantics<parallel>], iteration_bounds = array<i64: 1>, scalar_prefetch = 0 : i64, scratch_operands = 0 : i64, tpu.core_type = #tpu.core_type<tc>, window_params = [{transform_indices = @transform_0, window_bounds = array<i64: 8, 128>}, {transform_indices = @transform_1, window_bounds = array<i64: 1, 128, 128>}, {transform_indices = @transform_2, window_bounds = array<i64: 1, 128, 128>}, {transform_indices = @transform_3, window_bounds = array<i64: 1, 8, 128>}, {transform_indices = @transform_4, window_bounds = array<i64: 8, 256>}]} {
    %c0 = arith.constant 0 : index
    %c0_0 = arith.constant 0 : index
    %0 = vector.load %arg1[%c0, %c0_0] : memref<8x128xbf16, #tpu.memory_space<vmem>>, vector<8x128xbf16>
    %c0_1 = arith.constant 0 : index
    %c0_2 = arith.constant 0 : index
    %c0_3 = arith.constant 0 : index
    %1 = vector.load %arg2[%c0_1, %c0_2, %c0_3] : memref<1x128x128xbf16, #tpu.memory_space<vmem>>, vector<1x128x128xbf16>
    %2 = vector.shape_cast %1 : vector<1x128x128xbf16> to vector<128x128xbf16>
    %c0_4 = arith.constant 0 : index
    %c0_5 = arith.constant 0 : index
    %c0_6 = arith.constant 0 : index
    %3 = vector.load %arg3[%c0_4, %c0_5, %c0_6] : memref<1x128x128xf32, #tpu.memory_space<vmem>>, vector<1x128x128xf32>
    %4 = vector.shape_cast %3 : vector<1x128x128xf32> to vector<128x128xf32>
    %c0_7 = arith.constant 0 : index
    %c0_8 = arith.constant 0 : index
    %c0_9 = arith.constant 0 : index
    %5 = vector.load %arg4[%c0_7, %c0_8, %c0_9] : memref<1x8x128xf32, #tpu.memory_space<vmem>>, vector<1x8x128xf32>
    %6 = vector.shape_cast %5 : vector<1x8x128xf32> to vector<8x128xf32>
    %cst = arith.constant dense<0.000000e+00> : vector<8x128xf32>
    %7 = tpu.matmul %0, %2, %cst {dimension_numbers = #tpu.dot_dimension_numbers<[1], [0], [0], [1], [0, 0, 1, 1], [], []>} : vector<8x128xbf16>, vector<128x128xbf16>, vector<8x128xf32> -> vector<8x128xf32>
    %8 = vector.extract_strided_slice %6 {offsets = [0, 0], sizes = [1, 128], strides = [1, 1]} : vector<8x128xf32> to vector<1x128xf32>
    %9 = vector.broadcast %8 : vector<1x128xf32> to vector<8x128xf32>
    %10 = arith.addf %7, %9 : vector<8x128xf32>
    %11 = math.tanh %10 : vector<8x128xf32>
    %cst_10 = arith.constant dense<0.000000e+00> : vector<128xf32>
    %12 = vector.multi_reduction <add>, %11, %cst_10 [0] : vector<8x128xf32> to vector<128xf32>
    %13 = vector.shape_cast %12 : vector<128xf32> to vector<1x128xf32>
    %cst_11 = arith.constant 1.250000e-01 : f32
    %14 = vector.broadcast %cst_11 : f32 to vector<1x128xf32>
    %15 = arith.mulf %13, %14 : vector<1x128xf32>
    %16 = vector.broadcast %15 : vector<1x128xf32> to vector<8x128xf32>
    %17 = arith.subf %11, %16 : vector<8x128xf32>
    %18 = arith.mulf %17, %17 : vector<8x128xf32>
    %cst_12 = arith.constant dense<0.000000e+00> : vector<128xf32>
    %19 = vector.multi_reduction <add>, %18, %cst_12 [0] : vector<8x128xf32> to vector<128xf32>
    %20 = vector.shape_cast %19 : vector<128xf32> to vector<1x128xf32>
    %cst_13 = arith.constant 1.250000e-01 : f32
    %21 = vector.broadcast %cst_13 : f32 to vector<1x128xf32>
    %22 = arith.mulf %20, %21 : vector<1x128xf32>
    %23 = vector.extract_strided_slice %6 {offsets = [1, 0], sizes = [1, 128], strides = [1, 1]} : vector<8x128xf32> to vector<1x128xf32>
    %cst_14 = arith.constant 9.99999974E-6 : f32
    %24 = vector.broadcast %cst_14 : f32 to vector<1x128xf32>
    %25 = arith.addf %22, %24 : vector<1x128xf32>
    %26 = math.rsqrt %25 : vector<1x128xf32>
    %27 = vector.broadcast %26 : vector<1x128xf32> to vector<8x128xf32>
    %28 = arith.mulf %17, %27 : vector<8x128xf32>
    %29 = vector.broadcast %23 : vector<1x128xf32> to vector<8x128xf32>
    %30 = arith.mulf %29, %28 : vector<8x128xf32>
    %31 = vector.extract_strided_slice %6 {offsets = [2, 0], sizes = [1, 128], strides = [1, 1]} : vector<8x128xf32> to vector<1x128xf32>
    %32 = vector.broadcast %31 : vector<1x128xf32> to vector<8x128xf32>
    %33 = arith.addf %30, %32 : vector<8x128xf32>
    %cst_15 = arith.constant dense<0.000000e+00> : vector<8x128xf32>
    %34 = tpu.matmul %33, %4, %cst_15 {dimension_numbers = #tpu.dot_dimension_numbers<[1], [0], [0], [1], [0, 0, 1, 1], [], []>} : vector<8x128xf32>, vector<128x128xf32>, vector<8x128xf32> -> vector<8x128xf32>
    %35 = vector.extract_strided_slice %6 {offsets = [3, 0], sizes = [1, 128], strides = [1, 1]} : vector<8x128xf32> to vector<1x128xf32>
    %36 = vector.broadcast %35 : vector<1x128xf32> to vector<8x128xf32>
    %37 = arith.addf %34, %36 : vector<8x128xf32>
    %38 = math.tanh %37 : vector<8x128xf32>
    %39 = vector.extract_strided_slice %6 {offsets = [4, 0], sizes = [1, 128], strides = [1, 1]} : vector<8x128xf32> to vector<1x128xf32>
    %40 = vector.broadcast %39 : vector<1x128xf32> to vector<8x128xf32>
    %41 = arith.mulf %38, %40 : vector<8x128xf32>
    %42 = vector.extract_strided_slice %6 {offsets = [5, 0], sizes = [1, 128], strides = [1, 1]} : vector<8x128xf32> to vector<1x128xf32>
    %43 = vector.broadcast %42 : vector<1x128xf32> to vector<8x128xf32>
    %44 = arith.addf %41, %43 : vector<8x128xf32>
    %c0_16 = arith.constant 0 : index
    %c0_17 = arith.constant 0 : index
    %45 = vector.load %arg5[%c0_16, %c0_17] : memref<8x256xf32, #tpu.memory_space<vmem>>, vector<8x128xf32>
    tpu.vector_store %arg5[%c0_16, %c0_17], %33 {strides = array<i32>} : memref<8x256xf32, #tpu.memory_space<vmem>>, vector<8x128xf32>,
    %c0_18 = arith.constant 0 : index
    %c128 = arith.constant 128 : index
    %46 = vector.load %arg5[%c0_18, %c128] : memref<8x256xf32, #tpu.memory_space<vmem>>, vector<8x128xf32>
    tpu.vector_store %arg5[%c0_18, %c128], %44 {strides = array<i32>} : memref<8x256xf32, #tpu.memory_space<vmem>>, vector<8x128xf32>,
    return
  }
  func.func @transform_0(%arg0: i32) -> (i32, i32) {
    %c0_i32 = arith.constant 0 : i32
    %c0_i32_0 = arith.constant 0 : i32
    return %c0_i32, %arg0 : i32, i32
  }
  func.func @transform_1(%arg0: i32) -> (i32, i32, i32) {
    %c0_i32 = arith.constant 0 : i32
    %c0_i32_0 = arith.constant 0 : i32
    %c0_i32_1 = arith.constant 0 : i32
    return %arg0, %c0_i32, %c0_i32_0 : i32, i32, i32
  }
  func.func @transform_2(%arg0: i32) -> (i32, i32, i32) {
    %c0_i32 = arith.constant 0 : i32
    %c0_i32_0 = arith.constant 0 : i32
    %c0_i32_1 = arith.constant 0 : i32
    return %arg0, %c0_i32, %c0_i32_0 : i32, i32, i32
  }
  func.func @transform_3(%arg0: i32) -> (i32, i32, i32) {
    %c0_i32 = arith.constant 0 : i32
    %c0_i32_0 = arith.constant 0 : i32
    %c0_i32_1 = arith.constant 0 : i32
    return %arg0, %c0_i32, %c0_i32_0 : i32, i32, i32
  }
  func.func @transform_4(%arg0: i32) -> (i32, i32) {
    %c0_i32 = arith.constant 0 : i32
    %c0_i32_0 = arith.constant 0 : i32
    return %c0_i32, %arg0 : i32, i32
  }
}

module attributes {stable_mosaic.version = 11 : i64} {
  func.func @_layer_fused_kernel(%arg0: i32, %arg1: memref<8x128xbf16, #tpu.memory_space<vmem>>, %arg2: memref<1x128x128xbf16, #tpu.memory_space<vmem>>, %arg3: memref<1x128x128xf32, #tpu.memory_space<vmem>>, %arg4: memref<1x8x128xf32, #tpu.memory_space<vmem>>, %arg5: memref<8x256xf32, #tpu.memory_space<vmem>>) attributes {dimension_semantics = [#tpu.dimension_semantics<parallel>], iteration_bounds = array<i64: 1>, scalar_prefetch = 0 : i64, scratch_operands = 0 : i64, tpu.core_type = #tpu.core_type<tc>, window_params = [{transform_indices = @transform_0, window_bounds = array<i64: 8, 128>}, {transform_indices = @transform_1, window_bounds = array<i64: 1, 128, 128>}, {transform_indices = @transform_2, window_bounds = array<i64: 1, 128, 128>}, {transform_indices = @transform_3, window_bounds = array<i64: 1, 8, 128>}, {transform_indices = @transform_4, window_bounds = array<i64: 8, 256>}]} {
    %c0 = arith.constant 0 : index
    %c0_0 = arith.constant 0 : index
    %0 = vector.load %arg1[%c0, %c0_0] : memref<8x128xbf16, #tpu.memory_space<vmem>>, vector<8x128xbf16>
    %c0_1 = arith.constant 0 : index
    %c0_2 = arith.constant 0 : index
    %c0_3 = arith.constant 0 : index
    %1 = vector.load %arg2[%c0_1, %c0_2, %c0_3] : memref<1x128x128xbf16, #tpu.memory_space<vmem>>, vector<1x128x128xbf16>
    %2 = vector.shape_cast %1 : vector<1x128x128xbf16> to vector<128x128xbf16>
    %c0_4 = arith.constant 0 : index
    %c0_5 = arith.constant 0 : index
    %c0_6 = arith.constant 0 : index
    %3 = vector.load %arg3[%c0_4, %c0_5, %c0_6] : memref<1x128x128xf32, #tpu.memory_space<vmem>>, vector<1x128x128xf32>
    %4 = vector.shape_cast %3 : vector<1x128x128xf32> to vector<128x128xf32>
    %c0_7 = arith.constant 0 : index
    %c0_8 = arith.constant 0 : index
    %c0_9 = arith.constant 0 : index
    %5 = vector.load %arg4[%c0_7, %c0_8, %c0_9] : memref<1x8x128xf32, #tpu.memory_space<vmem>>, vector<1x8x128xf32>
    %6 = vector.shape_cast %5 : vector<1x8x128xf32> to vector<8x128xf32>
    %cst = arith.constant dense<0.000000e+00> : vector<8x128xf32>
    %7 = tpu.matmul %0, %2, %cst {dimension_numbers = #tpu.dot_dimension_numbers<[1], [0], [0], [1], [0, 0, 1, 1], [], []>} : vector<8x128xbf16>, vector<128x128xbf16>, vector<8x128xf32> -> vector<8x128xf32>
    %8 = vector.extract_strided_slice %6 {offsets = [0, 0], sizes = [1, 128], strides = [1, 1]} : vector<8x128xf32> to vector<1x128xf32>
    %9 = vector.broadcast %8 : vector<1x128xf32> to vector<8x128xf32>
    %10 = arith.addf %7, %9 : vector<8x128xf32>
    %11 = math.tanh %10 : vector<8x128xf32>
    %cst_10 = arith.constant dense<0.000000e+00> : vector<128xf32>
    %12 = vector.multi_reduction <add>, %11, %cst_10 [0] : vector<8x128xf32> to vector<128xf32>
    %13 = vector.shape_cast %12 : vector<128xf32> to vector<1x128xf32>
    %cst_11 = arith.constant 1.250000e-01 : f32
    %14 = vector.broadcast %cst_11 : f32 to vector<1x128xf32>
    %15 = arith.mulf %13, %14 : vector<1x128xf32>
    %16 = vector.broadcast %15 : vector<1x128xf32> to vector<8x128xf32>
    %17 = arith.subf %11, %16 : vector<8x128xf32>
    %18 = arith.mulf %17, %17 : vector<8x128xf32>
    %cst_12 = arith.constant dense<0.000000e+00> : vector<128xf32>
    %19 = vector.multi_reduction <add>, %18, %cst_12 [0] : vector<8x128xf32> to vector<128xf32>
    %20 = vector.shape_cast %19 : vector<128xf32> to vector<1x128xf32>
    %cst_13 = arith.constant 1.250000e-01 : f32
    %21 = vector.broadcast %cst_13 : f32 to vector<1x128xf32>
    %22 = arith.mulf %20, %21 : vector<1x128xf32>
    %23 = vector.extract_strided_slice %6 {offsets = [1, 0], sizes = [1, 128], strides = [1, 1]} : vector<8x128xf32> to vector<1x128xf32>
    %cst_14 = arith.constant 9.99999974E-6 : f32
    %24 = vector.broadcast %cst_14 : f32 to vector<1x128xf32>
    %25 = arith.addf %22, %24 : vector<1x128xf32>
    %26 = math.rsqrt %25 : vector<1x128xf32>
    %27 = vector.broadcast %26 : vector<1x128xf32> to vector<8x128xf32>
    %28 = arith.mulf %17, %27 : vector<8x128xf32>
    %29 = vector.broadcast %23 : vector<1x128xf32> to vector<8x128xf32>
    %30 = arith.mulf %29, %28 : vector<8x128xf32>
    %31 = vector.extract_strided_slice %6 {offsets = [2, 0], sizes = [1, 128], strides = [1, 1]} : vector<8x128xf32> to vector<1x128xf32>
    %32 = vector.broadcast %31 : vector<1x128xf32> to vector<8x128xf32>
    %33 = arith.addf %30, %32 : vector<8x128xf32>
    %cst_15 = arith.constant dense<0.000000e+00> : vector<8x128xf32>
    %34 = tpu.matmul %33, %4, %cst_15 {dimension_numbers = #tpu.dot_dimension_numbers<[1], [0], [0], [1], [0, 0, 1, 1], [], []>} : vector<8x128xf32>, vector<128x128xf32>, vector<8x128xf32> -> vector<8x128xf32>
    %35 = vector.extract_strided_slice %6 {offsets = [3, 0], sizes = [1, 128], strides = [1, 1]} : vector<8x128xf32> to vector<1x128xf32>
    %36 = vector.broadcast %35 : vector<1x128xf32> to vector<8x128xf32>
    %37 = arith.addf %34, %36 : vector<8x128xf32>
    %38 = math.tanh %37 : vector<8x128xf32>
    %39 = vector.extract_strided_slice %6 {offsets = [4, 0], sizes = [1, 128], strides = [1, 1]} : vector<8x128xf32> to vector<1x128xf32>
    %40 = vector.broadcast %39 : vector<1x128xf32> to vector<8x128xf32>
    %41 = arith.mulf %38, %40 : vector<8x128xf32>
    %42 = vector.extract_strided_slice %6 {offsets = [5, 0], sizes = [1, 128], strides = [1, 1]} : vector<8x128xf32> to vector<1x128xf32>
    %43 = vector.broadcast %42 : vector<1x128xf32> to vector<8x128xf32>
    %44 = arith.addf %41, %43 : vector<8x128xf32>
    %c0_16 = arith.constant 0 : index
    %c0_17 = arith.constant 0 : index
    %45 = vector.load %arg5[%c0_16, %c0_17] : memref<8x256xf32, #tpu.memory_space<vmem>>, vector<8x128xf32>
    tpu.vector_store %arg5[%c0_16, %c0_17], %33 {strides = array<i32>} : memref<8x256xf32, #tpu.memory_space<vmem>>, vector<8x128xf32>,
    %c0_18 = arith.constant 0 : index
    %c128 = arith.constant 128 : index
    %46 = vector.load %arg5[%c0_18, %c128] : memref<8x256xf32, #tpu.memory_space<vmem>>, vector<8x128xf32>
    tpu.vector_store %arg5[%c0_18, %c128], %44 {strides = array<i32>} : memref<8x256xf32, #tpu.memory_space<vmem>>, vector<8x128xf32>,
    return
  }
  func.func @transform_0(%arg0: i32) -> (i32, i32) {
    %c0_i32 = arith.constant 0 : i32
    %c0_i32_0 = arith.constant 0 : i32
    return %c0_i32, %arg0 : i32, i32
  }
  func.func @transform_1(%arg0: i32) -> (i32, i32, i32) {
    %c0_i32 = arith.constant 0 : i32
    %c0_i32_0 = arith.constant 0 : i32
    %c0_i32_1 = arith.constant 0 : i32
    return %arg0, %c0_i32, %c0_i32_0 : i32, i32, i32
  }
  func.func @transform_2(%arg0: i32) -> (i32, i32, i32) {
    %c0_i32 = arith.constant 0 : i32
    %c0_i32_0 = arith.constant 0 : i32
    %c0_i32_1 = arith.constant 0 : i32
    return %arg0, %c0_i32, %c0_i32_0 : i32, i32, i32
  }
  func.func @transform_3(%arg0: i32) -> (i32, i32, i32) {
    %c0_i32 = arith.constant 0 : i32
    %c0_i32_0 = arith.constant 0 : i32
    %c0_i32_1 = arith.constant 0 : i32
    return %arg0, %c0_i32, %c0_i32_0 : i32, i32, i32
  }
  func.func @transform_4(%arg0: i32) -> (i32, i32) {
    %c0_i32 = arith.constant 0 : i32
    %c0_i32_0 = arith.constant 0 : i32
    return %c0_i32, %arg0 : i32, i32
  }
}

</mosaic_0001>

<llo_original>
// kernel: drugcell_forward.4
$region0: #{drugcell_forward.4}
  #allocation0 [shape = 'u32[]', space=smem, size = 0x4, offset = 0x4, fixed_abs, tag = 'smem constant byte address 0x4 - core index']
  #allocation1 [shape = 'u32[144,128]{1,0:T(1,128)}', space=vmem, size = 0x12000, scoped, tag = 'internal scratch']
  #allocation2 [shape = 'f32[8,128]{1,0:T(8,128)}', space=vmem, size = 0x1000, scoped, tag = 'scratch operand']
  %s0 = inlined_call_operand.vmem [shape: bf16[8,16], index: 0, kind: input, shape index: {}]
  %s1 = inlined_call_operand.hbm [shape: bf16[16,128], index: 1, kind: input, shape index: {}]
  %s2 = inlined_call_operand.hbm [shape: f32[1,128], index: 2, kind: input, shape index: {}]
  %s3 = inlined_call_operand.vmem [shape: f32[8,128], index: 3, kind: output, shape index: {}]
  %s4 = sld [smem:[#allocation0]]
  $region38: #{drugcell_forward.4} parent=0
    _
  %s6 = ssub.s32 1, %s4
  %s7 = scalar_select 0, %s6, %s4
  $region1: #{drugcell_forward.4} parent=0
    #allocation3 [shape = 'u8[4096]{0}', space=vmem, size = 0x1000, scoped, tag = 'input window, operand 1, single buffered']
    #allocation4 [shape = 's32[1]{0}', space=sflag, size = 0x4, scoped, tag = 'scoped memory for drugcell_forward.4']
    #allocation5 [shape = 'u8[512]{0}', space=vmem, size = 0x400, scoped, tag = 'input window, operand 2, single buffered']
    #allocation6 [shape = 's32[1]{0}', space=sflag, size = 0x4, scoped, tag = 'scoped memory for drugcell_forward.4']
    %8 = vsyncpa [#allocation4], 0
    %9 = vsyncpa [#allocation6], 0
    // Predicated region
    $region2: #{drugcell_forward.4} parent=1 // pred_check
      _
    $region3: #{drugcell_forward.4} parent=1 // pred_check_branch
      %11 = sbr.rel (0) target = $region5
    $region4: #{drugcell_forward.4} parent=1 // pred_region
      _
    $region5: #{drugcell_forward.4} parent=1 // pred_fallthru
      _
    // Predicated region
    $region6: #{drugcell_forward.4} parent=1 // pred_check
      _
    $region7: #{drugcell_forward.4} parent=1 // pred_check_branch
      %13 = sbr.rel (0) target = $region9
    $region8: #{drugcell_forward.4} parent=1 // pred_region
      %s15 = ssub.s32 128, 128
      %16 = vsyncadd [#allocation4], %s15
      %s17 = sshll.u32 [#allocation3], 4
      %s18 = int_to_ptr.vmem [resolvable:$true] %s17
      %23 = dma.hbm_to_vmem [thread:$0]  %s1, 128, %s18, [#allocation4], 64, 64, 4
    $region9: #{drugcell_forward.4} parent=1 // pred_fallthru
      _
    // Predicated region
    $region10: #{drugcell_forward.4} parent=1 // pred_check
      _
    $region11: #{drugcell_forward.4} parent=1 // pred_check_branch
      %25 = sbr.rel (0) target = $region13
    $region12: #{drugcell_forward.4} parent=1 // pred_region
      %s27 = ssub.s32 16, 16
      %28 = vsyncadd [#allocation6], %s27
      %s30 = sshll.u32 [#allocation5], 4
      %s31 = int_to_ptr.vmem [resolvable:$true] %s30
      %33 = dma.hbm_to_vmem [thread:$0]  %s2, 16, %s31, [#allocation6]
    $region13: #{drugcell_forward.4} parent=1 // pred_fallthru
      _
    // Predicated region
    $region14: #{drugcell_forward.4} parent=1 // pred_check
      _
    $region15: #{drugcell_forward.4} parent=1 // pred_check_branch
      %35 = sbr.rel (0) target = $region17
    $region16: #{drugcell_forward.4} parent=1 // pred_region
      %36 = dma.done [#allocation4], 128
    $region17: #{drugcell_forward.4} parent=1 // pred_fallthru
      _
    // Predicated region
    $region18: #{drugcell_forward.4} parent=1 // pred_check
      _
    $region19: #{drugcell_forward.4} parent=1 // pred_check_branch
      %38 = sbr.rel (0) target = $region21
    $region20: #{drugcell_forward.4} parent=1 // pred_region
      %39 = dma.done [#allocation6], 16
    $region21: #{drugcell_forward.4} parent=1 // pred_fallthru
      _
    %p41 = scmp.eq.s32.totalorder 0, 0
    // Predicated region
    $region22: #{drugcell_forward.4} parent=1 // pred_check
      %p42 = pneg %p41
    $region23: #{drugcell_forward.4} parent=1 // pred_check_branch
      %44 = sbr.rel (%p42) target = $region25
    $region24: #{drugcell_forward.4} parent=1 // pred_region
      %45 = vst [vmem:[#allocation2] sm:$0xff] 0.0
    $region25: #{drugcell_forward.4} parent=1 // pred_fallthru
      _
    %v46 = vld [vmem:[#allocation2] sm:$0xff]
    %v47 = vld [vmem:[%s0] sm:$0xf]
    %v48 = vld [vmem:[#allocation3] sm:$0xf]
    %v49 = vld [vmem:[#allocation3 + $0x4] sm:$0xf]
    %v52 = vunpack.c.l.b16 %v48
    %v53 = vunpack.c.l.b16 %v49
    %v54 = vpack.c.b16 %v53, %v52
    %vm56 = vcmask 130048
    %v58 = vsel %vm56, %v47, 0
    %60 = vmatprep.subr.bf16.mxu0 0
    %61 = vmatpush1.bf16.msra.mxu0 0
    %62 = vmatprep.subr.bf16.mxu0 0
    %63 = vmatpush1.bf16.msra.mxu0 0
    %64 = vmatprep.subr.bf16.mxu0 0
    %65 = vmatpush1.bf16.msra.mxu0 0
    %66 = vmatprep.subr.bf16.mxu0 0
    %67 = vmatpush1.bf16.msra.mxu0 0
    %68 = vmatprep.subr.bf16.mxu0 0
    %69 = vmatpush1.bf16.msra.mxu0 0
    %70 = vmatprep.subr.bf16.mxu0 0
    %71 = vmatpush1.bf16.msra.mxu0 0
    %72 = vmatprep.subr.bf16.mxu0 0
    %73 = vmatpush1.bf16.msra.mxu0 0
    %74 = vmatprep.subr.bf16.mxu0 0
    %75 = vmatpush1.bf16.msra.mxu0 %v54
    %76 = vmatprep.subr.bf16.mxu0 0
    %77 = vmatpush2.bf16.msra.mxu0 0
    %78 = vmatprep.subr.bf16.mxu0 0
    %79 = vmatpush2.bf16.msra.mxu0 0
    %80 = vmatprep.subr.bf16.mxu0 0
    %81 = vmatpush2.bf16.msra.mxu0 0
    %82 = vmatprep.subr.bf16.mxu0 0
    %83 = vmatpush2.bf16.msra.mxu0 0
    %84 = vmatprep.subr.bf16.mxu0 0
    %85 = vmatpush2.bf16.msra.mxu0 0
    %86 = vmatprep.subr.bf16.mxu0 0
    %87 = vmatpush2.bf16.msra.mxu0 0
    %88 = vmatprep.subr.bf16.mxu0 0
    %89 = vmatpush2.bf16.msra.mxu0 0
    %90 = vmatprep.subr.bf16.mxu0 0
    %91 = vmatpush2.bf16.msra.mxu0 0
    %92 = vmatprep.mubr.bf16.mxu0 0
    %93 = vmatmul.mubr.bf16.gmra.mxu0 %v58
    %v94 = vpop.f32.mrf.mxu0
    %v95 = vadd.f32 0.0, %v94
    %v96 = vpop.f32.mrf.mxu0
    %v97 = vpop.f32.mrf.mxu0
    %v98 = vpop.f32.mrf.mxu0
    %99 = vdwg.mxu0
    %v100 = vadd.f32 %v46, %v95
    %101 = vst [vmem:[#allocation2] sm:$0xff] %v100
    // Predicated region
    $region26: #{drugcell_forward.4} parent=1 // pred_check
      %p102 = pneg %p41
    $region27: #{drugcell_forward.4} parent=1 // pred_check_branch
      %104 = sbr.rel (%p102) target = $region29
    $region28: #{drugcell_forward.4} parent=1 // pred_region
      %v105 = vld [vmem:[#allocation2] sm:$0xff]
      %v106 = vld [vmem:[#allocation5] sm:$0x1]
      %v108 = vlaneseq
      %v109 = vshrl.u32 %v108, 7
      %v110 = vsub.s32 0, %v109
      %v111 = vrot.slane %v106, %v110
      %v113 = vadd.f32 %v105, %v111
      %114 = vst [vmem:[%s3] sm:$0xff] %v113
    $region29: #{drugcell_forward.4} parent=1 // pred_fallthru
      _
    // Predicated region
    $region30: #{drugcell_forward.4} parent=1 // pred_check
      _
    $region31: #{drugcell_forward.4} parent=1 // pred_check_branch
      %116 = sbr.rel (0) target = $region33
    $region32: #{drugcell_forward.4} parent=1 // pred_region
      _
    $region33: #{drugcell_forward.4} parent=1 // pred_fallthru
      _
    // Predicated region
    $region34: #{drugcell_forward.4} parent=1 // pred_check
      _
    $region35: #{drugcell_forward.4} parent=1 // pred_check_branch
      %118 = sbr.rel (0) target = $region37
    $region36: #{drugcell_forward.4} parent=1 // pred_region
      _
    $region37: #{drugcell_forward.4} parent=1 // pred_fallthru
      _
    %119 = vsyncpa [#allocation4], 1
    %120 = vsyncpa [#allocation6], 1

// kernel: drugcell_forward.5
$region0: #{drugcell_forward.5}
  #allocation0 [shape = 'u32[]', space=smem, size = 0x4, offset = 0x4, fixed_abs, tag = 'smem constant byte address 0x4 - core index']
  #allocation1 [shape = 'u32[144,128]{1,0:T(1,128)}', space=vmem, size = 0x12000, scoped, tag = 'internal scratch']
  %s0 = inlined_call_operand.vmem [shape: bf16[8,128], index: 0, kind: input, shape index: {}]
  %s1 = inlined_call_operand.vmem [shape: bf16[1,128,128], index: 1, kind: input, shape index: {}]
  %s2 = inlined_call_operand.hbm [shape: f32[1,128,128], index: 2, kind: input, shape index: {}]
  %s3 = inlined_call_operand.vmem [shape: f32[1,8,128], index: 3, kind: input, shape index: {}]
  %s4 = inlined_call_operand.vmem [shape: f32[8,256], index: 4, kind: output, shape index: {}]
  %s5 = sld [smem:[#allocation0]]
  $region30: #{drugcell_forward.5} parent=0
    _
  %s7 = ssub.s32 1, %s5
  %s8 = scalar_select 0, %s7, %s5
  $region1: #{drugcell_forward.5} parent=0
    #allocation2 [shape = 'u8[65536]{0}', space=vmem, size = 0x10000, scoped, tag = 'input window, operand 2, single buffered']
    #allocation3 [shape = 's32[1]{0}', space=sflag, size = 0x4, scoped, tag = 'scoped memory for drugcell_forward.5']
    %9 = vsyncpa [#allocation3], 0
    // Predicated region
    $region2: #{drugcell_forward.5} parent=1 // pred_check
      _
    $region3: #{drugcell_forward.5} parent=1 // pred_check_branch
      %11 = sbr.rel (0) target = $region5
    $region4: #{drugcell_forward.5} parent=1 // pred_region
      _
    $region5: #{drugcell_forward.5} parent=1 // pred_fallthru
      _
    // Predicated region
    $region6: #{drugcell_forward.5} parent=1 // pred_check
      _
    $region7: #{drugcell_forward.5} parent=1 // pred_check_branch
      %13 = sbr.rel (0) target = $region9
    $region8: #{drugcell_forward.5} parent=1 // pred_region
      _
    $region9: #{drugcell_forward.5} parent=1 // pred_fallthru
      _
    // Predicated region
    $region10: #{drugcell_forward.5} parent=1 // pred_check
      _
    $region11: #{drugcell_forward.5} parent=1 // pred_check_branch
      %15 = sbr.rel (0) target = $region13
    $region12: #{drugcell_forward.5} parent=1 // pred_region
      %s17 = ssub.s32 2048, 2048
      %18 = vsyncadd [#allocation3], %s17
      %s19 = sshll.u32 [#allocation2], 4
      %s20 = int_to_ptr.vmem [resolvable:$true] %s19
      %25 = dma.hbm_to_vmem [thread:$0]  %s2, 2048, %s20, [#allocation3], 128, 128, 8
    $region13: #{drugcell_forward.5} parent=1 // pred_fallthru
      _
    // Predicated region
    $region14: #{drugcell_forward.5} parent=1 // pred_check
      _
    $region15: #{drugcell_forward.5} parent=1 // pred_check_branch
      %27 = sbr.rel (0) target = $region17
    $region16: #{drugcell_forward.5} parent=1 // pred_region
      _
    $region17: #{drugcell_forward.5} parent=1 // pred_fallthru
      _
    // Predicated region
    $region18: #{drugcell_forward.5} parent=1 // pred_check
      _
    $region19: #{drugcell_forward.5} parent=1 // pred_check_branch
      %29 = sbr.rel (0) target = $region21
    $region20: #{drugcell_forward.5} parent=1 // pred_region
      %30 = dma.done [#allocation3], 2048
    $region21: #{drugcell_forward.5} parent=1 // pred_fallthru
      _
    %v32 = vld [vmem:[%s0] sm:$0xf]
    %v33 = vld [vmem:[%s1] sm:$0xf]
    %v34 = vld [vmem:[%s1 + $0x4] sm:$0xf]
    %v35 = vld [vmem:[%s1 + $0x8] sm:$0xf]
    %v36 = vld [vmem:[%s1 + $0xc] sm:$0xf]
    %v37 = vld [vmem:[%s1 + $0x10] sm:$0xf]
    %v38 = vld [vmem:[%s1 + $0x14] sm:$0xf]
    %v39 = vld [vmem:[%s1 + $0x18] sm:$0xf]
    %v40 = vld [vmem:[%s1 + $0x1c] sm:$0xf]
    %v41 = vld [vmem:[%s1 + $0x20] sm:$0xf]
    %v42 = vld [vmem:[%s1 + $0x24] sm:$0xf]
    %v43 = vld [vmem:[%s1 + $0x28] sm:$0xf]
    %v44 = vld [vmem:[%s1 + $0x2c] sm:$0xf]
    %v45 = vld [vmem:[%s1 + $0x30] sm:$0xf]
    %v46 = vld [vmem:[%s1 + $0x34] sm:$0xf]
    %v47 = vld [vmem:[%s1 + $0x38] sm:$0xf]
    %v48 = vld [vmem:[%s1 + $0x3c] sm:$0xf]
    %v49 = vld [vmem:[#allocation2] sm:$0xff]
    %v50 = vld [vmem:[#allocation2 + $0x8] sm:$0xff]
    %v51 = vld [vmem:[#allocation2 + $0x10] sm:$0xff]
    %v52 = vld [vmem:[#allocation2 + $0x18] sm:$0xff]
    %v53 = vld [vmem:[#allocation2 + $0x20] sm:$0xff]
    %v54 = vld [vmem:[#allocation2 + $0x28] sm:$0xff]
    %v55 = vld [vmem:[#allocation2 + $0x30] sm:$0xff]
    %v56 = vld [vmem:[#allocation2 + $0x38] sm:$0xff]
    %v57 = vld [vmem:[#allocation2 + $0x40] sm:$0xff]
    %v58 = vld [vmem:[#allocation2 + $0x48] sm:$0xff]
    %v59 = vld [vmem:[#allocation2 + $0x50] sm:$0xff]
    %v60 = vld [vmem:[#allocation2 + $0x58] sm:$0xff]
    %v61 = vld [vmem:[#allocation2 + $0x60] sm:$0xff]
    %v62 = vld [vmem:[#allocation2 + $0x68] sm:$0xff]
    %v63 = vld [vmem:[#allocation2 + $0x70] sm:$0xff]
    %v64 = vld [vmem:[#allocation2 + $0x78] sm:$0xff]
    %v65 = vld [vmem:[%s3] sm:$0xff]
    %v66 = vlaneseq
    %v67 = vshrl.u32 %v66, 7
    %v68 = vsub.s32 0, %v67
    %v69 = vrot.slane %v65, %v68
    %v86 = vunpack.c.l.b16 %v33
    %v87 = vunpack.c.l.b16 %v34
    %v88 = vunpack.c.l.b16 %v35
    %v89 = vunpack.c.l.b16 %v36
    %v90 = vunpack.c.l.b16 %v37
    %v91 = vunpack.c.l.b16 %v38
    %v92 = vunpack.c.l.b16 %v39
    %v93 = vunpack.c.l.b16 %v40
    %v94 = vunpack.c.l.b16 %v41
    %v95 = vunpack.c.l.b16 %v42
    %v96 = vunpack.c.l.b16 %v43
    %v97 = vunpack.c.l.b16 %v44
    %v98 = vunpack.c.l.b16 %v45
    %v99 = vunpack.c.l.b16 %v46
    %v100 = vunpack.c.l.b16 %v47
    %v101 = vunpack.c.l.b16 %v48
    %v102 = vpack.c.b16 %v87, %v86
    %v103 = vpack.c.b16 %v89, %v88
    %v104 = vpack.c.b16 %v91, %v90
    %v105 = vpack.c.b16 %v93, %v92
    %v106 = vpack.c.b16 %v95, %v94
    %v107 = vpack.c.b16 %v97, %v96
    %v108 = vpack.c.b16 %v99, %v98
    %v109 = vpack.c.b16 %v101, %v100
    %118 = vmatprep.subr.bf16.mxu0 0
    %119 = vmatpush1.bf16.msra.mxu0 %v109
    %120 = vmatprep.subr.bf16.mxu0 0
    %121 = vmatpush1.bf16.msra.mxu0 %v108
    %122 = vmatprep.subr.bf16.mxu0 0
    %123 = vmatpush1.bf16.msra.mxu0 %v107
    %124 = vmatprep.subr.bf16.mxu0 0
    %125 = vmatpush1.bf16.msra.mxu0 %v106
    %126 = vmatprep.subr.bf16.mxu0 0
    %127 = vmatpush1.bf16.msra.mxu0 %v105
    %128 = vmatprep.subr.bf16.mxu0 0
    %129 = vmatpush1.bf16.msra.mxu0 %v104
    %130 = vmatprep.subr.bf16.mxu0 0
    %131 = vmatpush1.bf16.msra.mxu0 %v103
    %132 = vmatprep.subr.bf16.mxu0 0
    %133 = vmatpush1.bf16.msra.mxu0 %v102
    %134 = vmatprep.subr.bf16.mxu0 0
    %135 = vmatpush2.bf16.msra.mxu0 0
    %136 = vmatprep.subr.bf16.mxu0 0
    %137 = vmatpush2.bf16.msra.mxu0 0
    %138 = vmatprep.subr.bf16.mxu0 0
    %139 = vmatpush2.bf16.msra.mxu0 0
    %140 = vmatprep.subr.bf16.mxu0 0
    %141 = vmatpush2.bf16.msra.mxu0 0
    %142 = vmatprep.subr.bf16.mxu0 0
    %143 = vmatpush2.bf16.msra.mxu0 0
    %144 = vmatprep.subr.bf16.mxu0 0
    %145 = vmatpush2.bf16.msra.mxu0 0
    %146 = vmatprep.subr.bf16.mxu0 0
    %147 = vmatpush2.bf16.msra.mxu0 0
    %148 = vmatprep.subr.bf16.mxu0 0
    %149 = vmatpush2.bf16.msra.mxu0 0
    %150 = vmatprep.mubr.bf16.mxu0 0
    %151 = vmatmul.mubr.bf16.gmra.mxu0 %v32
    %v152 = vpop.f32.mrf.mxu0
    %v153 = vadd.f32 %v69, %v152
    %v154 = vpop.f32.mrf.mxu0
    %v155 = vpop.f32.mrf.mxu0
    %v156 = vpop.f32.mrf.mxu0
    %157 = vdwg.mxu0
    %v158 = vtanh.pop %v153
    %v159 = vrot.slane %v158, 4
    %v160 = vadd.f32 %v158, %v159
    %v161 = vrot.slane %v160, 2
    %v162 = vadd.f32 %v160, %v161
    %v163 = vrot.slane %v162, 1
    %v164 = vadd.f32 %v162, %v163
    %v165 = vmul.f32 %v164, 0.125
    %v166 = vsub.f32 %v158, %v165
    %v167 = vmul.f32 %v166, %v166
    %v168 = vrot.slane %v167, 4
    %v169 = vadd.f32 %v167, %v168
    %v170 = vrot.slane %v169, 2
    %v171 = vadd.f32 %v169, %v170
    %v172 = vrot.slane %v171, 1
    %v173 = vadd.f32 %v171, %v172
    %v174 = vmul.f32 %v173, 0.125
    %v175 = vadd.f32 %v174, 1e-05
    %v176 = vrsqrt.pop %v175
    %v177 = vmul.f32 %v166, %v176
    %v178 = vlaneseq
    %v179 = vshrl.u32 %v178, 7
    %v180 = vsub.s32 1, %v179
    %v181 = vrot.slane %v65, %v180
    %v182 = vmul.f32 %v181, %v177
    %v183 = vlaneseq
    %v184 = vshrl.u32 %v183, 7
    %v185 = vsub.s32 2, %v184
    %v186 = vrot.slane %v65, %v185
    %v187 = vadd.f32 %v182, %v186
    %v188 = vlaneseq
    %v189 = vshrl.u32 %v188, 7
    %v190 = vsub.s32 3, %v189
    %v191 = vrot.slane %v65, %v190
    %192 = vmatprep.subr.mxu0 0.0
    %193 = vmatpush1.msra.mxu0 %v64
    %194 = vmatprep.subr.mxu0 0.0
    %195 = vmatpush1.msra.mxu0 %v63
    %196 = vmatprep.subr.mxu0 0.0
    %197 = vmatpush1.msra.mxu0 %v62
    %198 = vmatprep.subr.mxu0 0.0
    %199 = vmatpush1.msra.mxu0 %v61
    %200 = vmatprep.subr.mxu0 0.0
    %201 = vmatpush1.msra.mxu0 %v60
    %202 = vmatprep.subr.mxu0 0.0
    %203 = vmatpush1.msra.mxu0 %v59
    %204 = vmatprep.subr.mxu0 0.0
    %205 = vmatpush1.msra.mxu0 %v58
    %206 = vmatprep.subr.mxu0 0.0
    %207 = vmatpush1.msra.mxu0 %v57
    %208 = vmatprep.subr.mxu0 0.0
    %209 = vmatpush1.msra.mxu0 %v56
    %210 = vmatprep.subr.mxu0 0.0
    %211 = vmatpush1.msra.mxu0 %v55
    %212 = vmatprep.subr.mxu0 0.0
    %213 = vmatpush1.msra.mxu0 %v54
    %214 = vmatprep.subr.mxu0 0.0
    %215 = vmatpush1.msra.mxu0 %v53
    %216 = vmatprep.subr.mxu0 0.0
    %217 = vmatpush1.msra.mxu0 %v52
    %218 = vmatprep.subr.mxu0 0.0
    %219 = vmatpush1.msra.mxu0 %v51
    %220 = vmatprep.subr.mxu0 0.0
    %221 = vmatpush1.msra.mxu0 %v50
    %222 = vmatprep.subr.mxu0 0.0
    %223 = vmatpush1.msra.mxu0 %v49
    %224 = vmatprep.subr.mxu0 0.0
    %225 = vmatpush2.msra.mxu0 0.0
    %226 = vmatprep.subr.mxu0 0.0
    %227 = vmatpush2.msra.mxu0 0.0
    %228 = vmatprep.subr.mxu0 0.0
    %229 = vmatpush2.msra.mxu0 0.0
    %230 = vmatprep.subr.mxu0 0.0
    %231 = vmatpush2.msra.mxu0 0.0
    %232 = vmatprep.subr.mxu0 0.0
    %233 = vmatpush2.msra.mxu0 0.0
    %234 = vmatprep.subr.mxu0 0.0
    %235 = vmatpush2.msra.mxu0 0.0
    %236 = vmatprep.subr.mxu0 0.0
    %237 = vmatpush2.msra.mxu0 0.0
    %238 = vmatprep.subr.mxu0 0.0
    %239 = vmatpush2.msra.mxu0 0.0
    %240 = vmatprep.subr.mxu0 0.0
    %241 = vmatpush2.msra.mxu0 0.0
    %242 = vmatprep.subr.mxu0 0.0
    %243 = vmatpush2.msra.mxu0 0.0
    %244 = vmatprep.subr.mxu0 0.0
    %245 = vmatpush2.msra.mxu0 0.0
    %246 = vmatprep.subr.mxu0 0.0
    %247 = vmatpush2.msra.mxu0 0.0
    %248 = vmatprep.subr.mxu0 0.0
    %249 = vmatpush2.msra.mxu0 0.0
    %250 = vmatprep.subr.mxu0 0.0
    %251 = vmatpush2.msra.mxu0 0.0
    %252 = vmatprep.subr.mxu0 0.0
    %253 = vmatpush2.msra.mxu0 0.0
    %254 = vmatprep.subr.mxu0 0.0
    %255 = vmatpush2.msra.mxu0 0.0
    %256 = vmatprep.mubr.f32.mxu0 0.0
    %257 = vmatmul.mubr.f32.gmra.mxu0 %v187
    %v258 = vpop.f32.mrf.mxu0
    %v259 = vadd.f32 %v191, %v258
    %v260 = vpop.f32.mrf.mxu0
    %261 = vdwg.mxu0
    %v262 = vtanh.pop %v259
    %v263 = vlaneseq
    %v264 = vshrl.u32 %v263, 7
    %v265 = vsub.s32 4, %v264
    %v266 = vrot.slane %v65, %v265
    %v267 = vmul.f32 %v262, %v266
    %v268 = vlaneseq
    %v269 = vshrl.u32 %v268, 7
    %v270 = vsub.s32 5, %v269
    %v271 = vrot.slane %v65, %v270
    %v272 = vadd.f32 %v267, %v271
    %273 = vst [vmem:[%s4] sm:$0xff] %v187
    %274 = vst [vmem:[%s4 + $0x8] sm:$0xff] %v272
    // Predicated region
    $region22: #{drugcell_forward.5} parent=1 // pred_check
      _
    $region23: #{drugcell_forward.5} parent=1 // pred_check_branch
      %276 = sbr.rel (0) target = $region25
    $region24: #{drugcell_forward.5} parent=1 // pred_region
      _
    $region25: #{drugcell_forward.5} parent=1 // pred_fallthru
      _
    // Predicated region
    $region26: #{drugcell_forward.5} parent=1 // pred_check
      _
    $region27: #{drugcell_forward.5} parent=1 // pred_check_branch
      %278 = sbr.rel (0) target = $region29
    $region28: #{drugcell_forward.5} parent=1 // pred_region
      _
    $region29: #{drugcell_forward.5} parent=1 // pred_fallthru
      _
    %279 = vsyncpa [#allocation3], 1

// kernel: drugcell_forward.6
$region0: #{drugcell_forward.6}
  #allocation0 [shape = 'u32[]', space=smem, size = 0x4, offset = 0x4, fixed_abs, tag = 'smem constant byte address 0x4 - core index']
  #allocation1 [shape = 'u32[144,128]{1,0:T(1,128)}', space=vmem, size = 0x12000, scoped, tag = 'internal scratch']
  %s0 = inlined_call_operand.vmem [shape: bf16[8,128], index: 0, kind: input, shape index: {}]
  %s1 = inlined_call_operand.vmem [shape: bf16[1,128,128], index: 1, kind: input, shape index: {}]
  %s2 = inlined_call_operand.vmem [shape: f32[1,128,128], index: 2, kind: input, shape index: {}]
  %s3 = inlined_call_operand.vmem [shape: f32[1,8,128], index: 3, kind: input, shape index: {}]
  %s4 = inlined_call_operand.vmem [shape: f32[8,256], index: 4, kind: output, shape index: {}]
  %s5 = sld [smem:[#allocation0]]
  $region26: #{drugcell_forward.6} parent=0
    _
  %s7 = ssub.s32 1, %s5
  %s8 = scalar_select 0, %s7, %s5
  // Predicated region
  $region2: #{drugcell_forward.6} parent=0 // pred_check
    _
  $region3: #{drugcell_forward.6} parent=0 // pred_check_branch
    %10 = sbr.rel (0) target = $region5
  $region4: #{drugcell_forward.6} parent=0 // pred_region
    _
  $region5: #{drugcell_forward.6} parent=0 // pred_fallthru
    _
  // Predicated region
  $region6: #{drugcell_forward.6} parent=0 // pred_check
    _
  $region7: #{drugcell_forward.6} parent=0 // pred_check_branch
    %12 = sbr.rel (0) target = $region9
  $region8: #{drugcell_forward.6} parent=0 // pred_region
    _
  $region9: #{drugcell_forward.6} parent=0 // pred_fallthru
    _
  // Predicated region
  $region10: #{drugcell_forward.6} parent=0 // pred_check
    _
  $region11: #{drugcell_forward.6} parent=0 // pred_check_branch
    %14 = sbr.rel (0) target = $region13
  $region12: #{drugcell_forward.6} parent=0 // pred_region
    _
  $region13: #{drugcell_forward.6} parent=0 // pred_fallthru
    _
  // Predicated region
  $region14: #{drugcell_forward.6} parent=0 // pred_check
    _
  $region15: #{drugcell_forward.6} parent=0 // pred_check_branch
    %16 = sbr.rel (0) target = $region17
  $region16: #{drugcell_forward.6} parent=0 // pred_region
    _
  $region17: #{drugcell_forward.6} parent=0 // pred_fallthru
    _
  %v18 = vld [vmem:[%s0] sm:$0xf]
  %v19 = vld [vmem:[%s1] sm:$0xf]
  %v20 = vld [vmem:[%s1 + $0x4] sm:$0xf]
  %v21 = vld [vmem:[%s1 + $0x8] sm:$0xf]
  %v22 = vld [vmem:[%s1 + $0xc] sm:$0xf]
  %v23 = vld [vmem:[%s1 + $0x10] sm:$0xf]
  %v24 = vld [vmem:[%s1 + $0x14] sm:$0xf]
  %v25 = vld [vmem:[%s1 + $0x18] sm:$0xf]
  %v26 = vld [vmem:[%s1 + $0x1c] sm:$0xf]
  %v27 = vld [vmem:[%s1 + $0x20] sm:$0xf]
  %v28 = vld [vmem:[%s1 + $0x24] sm:$0xf]
  %v29 = vld [vmem:[%s1 + $0x28] sm:$0xf]
  %v30 = vld [vmem:[%s1 + $0x2c] sm:$0xf]
  %v31 = vld [vmem:[%s1 + $0x30] sm:$0xf]
  %v32 = vld [vmem:[%s1 + $0x34] sm:$0xf]
  %v33 = vld [vmem:[%s1 + $0x38] sm:$0xf]
  %v34 = vld [vmem:[%s1 + $0x3c] sm:$0xf]
  %v35 = vld [vmem:[%s2] sm:$0xff]
  %v36 = vld [vmem:[%s2 + $0x8] sm:$0xff]
  %v37 = vld [vmem:[%s2 + $0x10] sm:$0xff]
  %v38 = vld [vmem:[%s2 + $0x18] sm:$0xff]
  %v39 = vld [vmem:[%s2 + $0x20] sm:$0xff]
  %v40 = vld [vmem:[%s2 + $0x28] sm:$0xff]
  %v41 = vld [vmem:[%s2 + $0x30] sm:$0xff]
  %v42 = vld [vmem:[%s2 + $0x38] sm:$0xff]
  %v43 = vld [vmem:[%s2 + $0x40] sm:$0xff]
  %v44 = vld [vmem:[%s2 + $0x48] sm:$0xff]
  %v45 = vld [vmem:[%s2 + $0x50] sm:$0xff]
  %v46 = vld [vmem:[%s2 + $0x58] sm:$0xff]
  %v47 = vld [vmem:[%s2 + $0x60] sm:$0xff]
  %v48 = vld [vmem:[%s2 + $0x68] sm:$0xff]
  %v49 = vld [vmem:[%s2 + $0x70] sm:$0xff]
  %v50 = vld [vmem:[%s2 + $0x78] sm:$0xff]
  %v51 = vld [vmem:[%s3] sm:$0xff]
  %v52 = vlaneseq
  %v53 = vshrl.u32 %v52, 7
  %v54 = vsub.s32 0, %v53
  %v55 = vrot.slane %v51, %v54
  %v72 = vunpack.c.l.b16 %v19
  %v73 = vunpack.c.l.b16 %v20
  %v74 = vunpack.c.l.b16 %v21
  %v75 = vunpack.c.l.b16 %v22
  %v76 = vunpack.c.l.b16 %v23
  %v77 = vunpack.c.l.b16 %v24
  %v78 = vunpack.c.l.b16 %v25
  %v79 = vunpack.c.l.b16 %v26
  %v80 = vunpack.c.l.b16 %v27
  %v81 = vunpack.c.l.b16 %v28
  %v82 = vunpack.c.l.b16 %v29
  %v83 = vunpack.c.l.b16 %v30
  %v84 = vunpack.c.l.b16 %v31
  %v85 = vunpack.c.l.b16 %v32
  %v86 = vunpack.c.l.b16 %v33
  %v87 = vunpack.c.l.b16 %v34
  %v88 = vpack.c.b16 %v73, %v72
  %v89 = vpack.c.b16 %v75, %v74
  %v90 = vpack.c.b16 %v77, %v76
  %v91 = vpack.c.b16 %v79, %v78
  %v92 = vpack.c.b16 %v81, %v80
  %v93 = vpack.c.b16 %v83, %v82
  %v94 = vpack.c.b16 %v85, %v84
  %v95 = vpack.c.b16 %v87, %v86
  %104 = vmatprep.subr.bf16.mxu0 0
  %105 = vmatpush1.bf16.msra.mxu0 %v95
  %106 = vmatprep.subr.bf16.mxu0 0
  %107 = vmatpush1.bf16.msra.mxu0 %v94
  %108 = vmatprep.subr.bf16.mxu0 0
  %109 = vmatpush1.bf16.msra.mxu0 %v93
  %110 = vmatprep.subr.bf16.mxu0 0
  %111 = vmatpush1.bf16.msra.mxu0 %v92
  %112 = vmatprep.subr.bf16.mxu0 0
  %113 = vmatpush1.bf16.msra.mxu0 %v91
  %114 = vmatprep.subr.bf16.mxu0 0
  %115 = vmatpush1.bf16.msra.mxu0 %v90
  %116 = vmatprep.subr.bf16.mxu0 0
  %117 = vmatpush1.bf16.msra.mxu0 %v89
  %118 = vmatprep.subr.bf16.mxu0 0
  %119 = vmatpush1.bf16.msra.mxu0 %v88
  %120 = vmatprep.subr.bf16.mxu0 0
  %121 = vmatpush2.bf16.msra.mxu0 0
  %122 = vmatprep.subr.bf16.mxu0 0
  %123 = vmatpush2.bf16.msra.mxu0 0
  %124 = vmatprep.subr.bf16.mxu0 0
  %125 = vmatpush2.bf16.msra.mxu0 0
  %126 = vmatprep.subr.bf16.mxu0 0
  %127 = vmatpush2.bf16.msra.mxu0 0
  %128 = vmatprep.subr.bf16.mxu0 0
  %129 = vmatpush2.bf16.msra.mxu0 0
  %130 = vmatprep.subr.bf16.mxu0 0
  %131 = vmatpush2.bf16.msra.mxu0 0
  %132 = vmatprep.subr.bf16.mxu0 0
  %133 = vmatpush2.bf16.msra.mxu0 0
  %134 = vmatprep.subr.bf16.mxu0 0
  %135 = vmatpush2.bf16.msra.mxu0 0
  %136 = vmatprep.mubr.bf16.mxu0 0
  %137 = vmatmul.mubr.bf16.gmra.mxu0 %v18
  %v138 = vpop.f32.mrf.mxu0
  %v139 = vadd.f32 %v55, %v138
  %v140 = vpop.f32.mrf.mxu0
  %v141 = vpop.f32.mrf.mxu0
  %v142 = vpop.f32.mrf.mxu0
  %143 = vdwg.mxu0
  %v144 = vtanh.pop %v139
  %v145 = vrot.slane %v144, 4
  %v146 = vadd.f32 %v144, %v145
  %v147 = vrot.slane %v146, 2
  %v148 = vadd.f32 %v146, %v147
  %v149 = vrot.slane %v148, 1
  %v150 = vadd.f32 %v148, %v149
  %v151 = vmul.f32 %v150, 0.125
  %v152 = vsub.f32 %v144, %v151
  %v153 = vmul.f32 %v152, %v152
  %v154 = vrot.slane %v153, 4
  %v155 = vadd.f32 %v153, %v154
  %v156 = vrot.slane %v155, 2
  %v157 = vadd.f32 %v155, %v156
  %v158 = vrot.slane %v157, 1
  %v159 = vadd.f32 %v157, %v158
  %v160 = vmul.f32 %v159, 0.125
  %v161 = vadd.f32 %v160, 1e-05
  %v162 = vrsqrt.pop %v161
  %v163 = vmul.f32 %v152, %v162
  %v164 = vlaneseq
  %v165 = vshrl.u32 %v164, 7
  %v166 = vsub.s32 1, %v165
  %v167 = vrot.slane %v51, %v166
  %v168 = vmul.f32 %v167, %v163
  %v169 = vlaneseq
  %v170 = vshrl.u32 %v169, 7
  %v171 = vsub.s32 2, %v170
  %v172 = vrot.slane %v51, %v171
  %v173 = vadd.f32 %v168, %v172
  %v174 = vlaneseq
  %v175 = vshrl.u32 %v174, 7
  %v176 = vsub.s32 3, %v175
  %v177 = vrot.slane %v51, %v176
  %178 = vmatprep.subr.mxu0 0.0
  %179 = vmatpush1.msra.mxu0 %v50
  %180 = vmatprep.subr.mxu0 0.0
  %181 = vmatpush1.msra.mxu0 %v49
  %182 = vmatprep.subr.mxu0 0.0
  %183 = vmatpush1.msra.mxu0 %v48
  %184 = vmatprep.subr.mxu0 0.0
  %185 = vmatpush1.msra.mxu0 %v47
  %186 = vmatprep.subr.mxu0 0.0
  %187 = vmatpush1.msra.mxu0 %v46
  %188 = vmatprep.subr.mxu0 0.0
  %189 = vmatpush1.msra.mxu0 %v45
  %190 = vmatprep.subr.mxu0 0.0
  %191 = vmatpush1.msra.mxu0 %v44
  %192 = vmatprep.subr.mxu0 0.0
  %193 = vmatpush1.msra.mxu0 %v43
  %194 = vmatprep.subr.mxu0 0.0
  %195 = vmatpush1.msra.mxu0 %v42
  %196 = vmatprep.subr.mxu0 0.0
  %197 = vmatpush1.msra.mxu0 %v41
  %198 = vmatprep.subr.mxu0 0.0
  %199 = vmatpush1.msra.mxu0 %v40
  %200 = vmatprep.subr.mxu0 0.0
  %201 = vmatpush1.msra.mxu0 %v39
  %202 = vmatprep.subr.mxu0 0.0
  %203 = vmatpush1.msra.mxu0 %v38
  %204 = vmatprep.subr.mxu0 0.0
  %205 = vmatpush1.msra.mxu0 %v37
  %206 = vmatprep.subr.mxu0 0.0
  %207 = vmatpush1.msra.mxu0 %v36
  %208 = vmatprep.subr.mxu0 0.0
  %209 = vmatpush1.msra.mxu0 %v35
  %210 = vmatprep.subr.mxu0 0.0
  %211 = vmatpush2.msra.mxu0 0.0
  %212 = vmatprep.subr.mxu0 0.0
  %213 = vmatpush2.msra.mxu0 0.0
  %214 = vmatprep.subr.mxu0 0.0
  %215 = vmatpush2.msra.mxu0 0.0
  %216 = vmatprep.subr.mxu0 0.0
  %217 = vmatpush2.msra.mxu0 0.0
  %218 = vmatprep.subr.mxu0 0.0
  %219 = vmatpush2.msra.mxu0 0.0
  %220 = vmatprep.subr.mxu0 0.0
  %221 = vmatpush2.msra.mxu0 0.0
  %222 = vmatprep.subr.mxu0 0.0
  %223 = vmatpush2.msra.mxu0 0.0
  %224 = vmatprep.subr.mxu0 0.0
  %225 = vmatpush2.msra.mxu0 0.0
  %226 = vmatprep.subr.mxu0 0.0
  %227 = vmatpush2.msra.mxu0 0.0
  %228 = vmatprep.subr.mxu0 0.0
  %229 = vmatpush2.msra.mxu0 0.0
  %230 = vmatprep.subr.mxu0 0.0
  %231 = vmatpush2.msra.mxu0 0.0
  %232 = vmatprep.subr.mxu0 0.0
  %233 = vmatpush2.msra.mxu0 0.0
  %234 = vmatprep.subr.mxu0 0.0
  %235 = vmatpush2.msra.mxu0 0.0
  %236 = vmatprep.subr.mxu0 0.0
  %237 = vmatpush2.msra.mxu0 0.0
  %238 = vmatprep.subr.mxu0 0.0
  %239 = vmatpush2.msra.mxu0 0.0
  %240 = vmatprep.subr.mxu0 0.0
  %241 = vmatpush2.msra.mxu0 0.0
  %242 = vmatprep.mubr.f32.mxu0 0.0
  %243 = vmatmul.mubr.f32.gmra.mxu0 %v173
  %v244 = vpop.f32.mrf.mxu0
  %v245 = vadd.f32 %v177, %v244
  %v246 = vpop.f32.mrf.mxu0
  %247 = vdwg.mxu0
  %v248 = vtanh.pop %v245
  %v249 = vlaneseq
  %v250 = vshrl.u32 %v249, 7
  %v251 = vsub.s32 4, %v250
  %v252 = vrot.slane %v51, %v251
  %v253 = vmul.f32 %v248, %v252
  %v254 = vlaneseq
  %v255 = vshrl.u32 %v254, 7
  %v256 = vsub.s32 5, %v255
  %v257 = vrot.slane %v51, %v256
  %v258 = vadd.f32 %v253, %v257
  %259 = vst [vmem:[%s4] sm:$0xff] %v173
  %260 = vst [vmem:[%s4 + $0x8] sm:$0xff] %v258
  // Predicated region
  $region18: #{drugcell_forward.6} parent=0 // pred_check
    _
  $region19: #{drugcell_forward.6} parent=0 // pred_check_branch
    %262 = sbr.rel (0) target = $region21
  $region20: #{drugcell_forward.6} parent=0 // pred_region
    _
  $region21: #{drugcell_forward.6} parent=0 // pred_fallthru
    _
  // Predicated region
  $region22: #{drugcell_forward.6} parent=0 // pred_check
    _
  $region23: #{drugcell_forward.6} parent=0 // pred_check_branch
    %264 = sbr.rel (0) target = $region25
  $region24: #{drugcell_forward.6} parent=0 // pred_region
    _
  $region25: #{drugcell_forward.6} parent=0 // pred_fallthru
    _

</llo_original>
